<compile_context>
chip_gen: v5e
topology: v5e:2x2
jax: 0.10.0
libtpu: 0.0.40
codegen_flags: <defaults>
</compile_context>

<pallas_src>
import jax
import jax.numpy as jnp
from jax.experimental import pallas as pl
from jax.experimental.pallas import tpu as pltpu


def _round_up(n: int, m: int) -> int:
    return ((n + m - 1) // m) * m


def glu_kernel(g_ref, x_ref, wg_ref, bg_ref, wl_ref, bl_ref, o_ref):
    # g_ref:  (TB, Gp)    gating rows for this batch tile
    # x_ref:  (TB, Inp)   input rows for this batch tile
    # wg_ref: (Gp, Inp)   gate weight, transposed (PyTorch weight is (In, G))
    # bg_ref: (1, Inp)    gate bias
    # wl_ref: (Inp, Outp) lin weight, transposed (PyTorch weight is (Out, In))
    # bl_ref: (1, Outp)   lin bias
    # o_ref:  (TB, Outp)  output rows
    gate_pre = jnp.dot(g_ref[...], wg_ref[...],
                       preferred_element_type=jnp.float32) + bg_ref[...]
    gate = 1.0 / (1.0 + jnp.exp(-gate_pre))          # sigmoid (exp on EUP)
    gated_x = gate * x_ref[...].astype(jnp.float32)  # VPU elementwise
    out = jnp.dot(gated_x, wl_ref[...],
                  preferred_element_type=jnp.float32) + bl_ref[...]
    o_ref[...] = out.astype(o_ref.dtype)


def glu_forward(x, gating, w_gate, b_gate, w_lin, b_lin, *, batch_tile=128):
    """GLU forward matching the PyTorch module.

    x:      (B, In)   float input
    gating: (B, G)    gating input
    w_gate: (In, G)   PyTorch-layout nn.Linear(gating_size, input_size) weight
    b_gate: (In,)
    w_lin:  (Out, In) PyTorch-layout nn.Linear(input_size, output_size) weight
    b_lin:  (Out,)
    returns (B, Out)
    """
    B, In = x.shape
    G = gating.shape[1]
    Out = w_lin.shape[0]

    LANE, SUB = 128, 8
    In_p = _round_up(In, LANE)
    G_p = _round_up(G, LANE)
    Out_p = _round_up(Out, LANE)
    TB = min(batch_tile, _round_up(B, SUB))   # sublane-aligned batch tile
    B_p = _round_up(B, TB)

    # Zero-pad to TPU-friendly shapes.  Padded x columns are zero, so the
    # sigmoid(0)=0.5 gate values on padded In columns contribute nothing;
    # padded Out columns and padded batch rows are sliced off below.
    x_p = jnp.zeros((B_p, In_p), x.dtype).at[:B, :In].set(x)
    g_p = jnp.zeros((B_p, G_p), gating.dtype).at[:B, :G].set(gating)
    wg_t = jnp.zeros((G_p, In_p), w_gate.dtype).at[:G, :In].set(w_gate.T)
    bg = jnp.zeros((1, In_p), b_gate.dtype).at[0, :In].set(b_gate)
    wl_t = jnp.zeros((In_p, Out_p), w_lin.dtype).at[:In, :Out].set(w_lin.T)
    bl = jnp.zeros((1, Out_p), b_lin.dtype).at[0, :Out].set(b_lin)

    grid = (B_p // TB,)

    out_p = pl.pallas_call(
        glu_kernel,
        out_shape=jax.ShapeDtypeStruct((B_p, Out_p), x.dtype),
        grid_spec=pltpu.PrefetchScalarGridSpec(
            num_scalar_prefetch=0,
            grid=grid,
            in_specs=[
                pl.BlockSpec((TB, G_p), lambda b: (b, 0)),      # gating rows
                pl.BlockSpec((TB, In_p), lambda b: (b, 0)),     # x rows
                pl.BlockSpec((G_p, In_p), lambda b: (0, 0)),    # W_gate^T
                pl.BlockSpec((1, In_p), lambda b: (0, 0)),      # b_gate
                pl.BlockSpec((In_p, Out_p), lambda b: (0, 0)),  # W_lin^T
                pl.BlockSpec((1, Out_p), lambda b: (0, 0)),     # b_lin
            ],
            out_specs=pl.BlockSpec((TB, Out_p), lambda b: (b, 0)),
        ),
        compiler_params=pltpu.CompilerParams(
            dimension_semantics=("parallel",),   # megacore shards batch tiles
            vmem_limit_bytes=32 << 20,           # safe on v5e/v6e/v7x
        ),
    )(g_p, x_p, wg_t, bg, wl_t, bl)

    return out_p[:B, :Out]


if __name__ == "__main__":
    key = jax.random.PRNGKey(0)
    # batch=2, input_size=32, gating_size=8, output_size=16
    B, In, G, Out = 2, 32, 8, 16

    k_x, k_g, k_wg, k_bg, k_wl, k_bl = jax.random.split(key, 6)

    x = jax.random.normal(k_x, (B, In), dtype=jnp.float32)
    gating = jax.random.normal(k_g, (B, G), dtype=jnp.float32)

    # nn.Linear default init: U(-1/sqrt(in_features), 1/sqrt(in_features))
    bound_g = 1.0 / (G ** 0.5)
    w_gate = jax.random.uniform(k_wg, (In, G), jnp.float32, -bound_g, bound_g)
    b_gate = jax.random.uniform(k_bg, (In,), jnp.float32, -bound_g, bound_g)
    bound_l = 1.0 / (In ** 0.5)
    w_lin = jax.random.uniform(k_wl, (Out, In), jnp.float32, -bound_l, bound_l)
    b_lin = jax.random.uniform(k_bl, (Out,), jnp.float32, -bound_l, bound_l)

    out = glu_forward(x, gating, w_gate, b_gate, w_lin, b_lin)
    out = jax.block_until_ready(out)

    # Pure-JAX reference matching the PyTorch GLU module forward.
    g_ref = jax.nn.sigmoid(gating @ w_gate.T + b_gate)   # (B, In)
    ref = (g_ref * x) @ w_lin.T + b_lin                  # (B, Out)
    assert out.shape == (B, Out)
    assert jnp.allclose(out, ref, atol=1e-5, rtol=1e-5)

    print("KERNEL_OK")
</pallas_src>

<mosaic_0001>
module attributes {stable_mosaic.version = 11 : i64} {
  func.func @glu_kernel(%arg0: i32, %arg1: memref<8x128xf32, #tpu.memory_space<vmem>>, %arg2: memref<8x128xf32, #tpu.memory_space<vmem>>, %arg3: memref<128x128xf32, #tpu.memory_space<vmem>>, %arg4: memref<1x128xf32, #tpu.memory_space<vmem>>, %arg5: memref<128x128xf32, #tpu.memory_space<vmem>>, %arg6: memref<1x128xf32, #tpu.memory_space<vmem>>, %arg7: memref<8x128xf32, #tpu.memory_space<vmem>>) attributes {dimension_semantics = [#tpu.dimension_semantics<parallel>], iteration_bounds = array<i64: 1>, scalar_prefetch = 0 : i64, scratch_operands = 0 : i64, tpu.core_type = #tpu.core_type<tc>, window_params = [{transform_indices = @transform_0, window_bounds = array<i64: 8, 128>}, {transform_indices = @transform_1, window_bounds = array<i64: 8, 128>}, {pipeline_mode = #tpu.pipeline_mode<synchronous>, transform_indices = @transform_2, window_bounds = array<i64: 128, 128>}, {pipeline_mode = #tpu.pipeline_mode<synchronous>, transform_indices = @transform_3, window_bounds = array<i64: 1, 128>}, {pipeline_mode = #tpu.pipeline_mode<synchronous>, transform_indices = @transform_4, window_bounds = array<i64: 128, 128>}, {pipeline_mode = #tpu.pipeline_mode<synchronous>, transform_indices = @transform_5, window_bounds = array<i64: 1, 128>}, {transform_indices = @transform_6, window_bounds = array<i64: 8, 128>}]} {
    %c0 = arith.constant 0 : index
    %c0_0 = arith.constant 0 : index
    %0 = vector.load %arg1[%c0, %c0_0] : memref<8x128xf32, #tpu.memory_space<vmem>>, vector<8x128xf32>
    %c0_1 = arith.constant 0 : index
    %c0_2 = arith.constant 0 : index
    %1 = vector.load %arg3[%c0_1, %c0_2] : memref<128x128xf32, #tpu.memory_space<vmem>>, vector<128x128xf32>
    %cst = arith.constant dense<0.000000e+00> : vector<8x128xf32>
    %2 = tpu.matmul %0, %1, %cst {dimension_numbers = #tpu.dot_dimension_numbers<[1], [0], [0], [1], [0, 0, 1, 1], [], []>} : vector<8x128xf32>, vector<128x128xf32>, vector<8x128xf32> -> vector<8x128xf32>
    %c0_3 = arith.constant 0 : index
    %c0_4 = arith.constant 0 : index
    %3 = vector.load %arg4[%c0_3, %c0_4] : memref<1x128xf32, #tpu.memory_space<vmem>>, vector<1x128xf32>
    %4 = vector.broadcast %3 : vector<1x128xf32> to vector<8x128xf32>
    %5 = arith.addf %2, %4 : vector<8x128xf32>
    %cst_5 = arith.constant 0.000000e+00 : f32
    %6 = vector.broadcast %cst_5 : f32 to vector<8x128xf32>
    %7 = arith.subf %6, %5 : vector<8x128xf32>
    %8 = math.exp %7 : vector<8x128xf32>
    %cst_6 = arith.constant 1.000000e+00 : f32
    %9 = vector.broadcast %cst_6 : f32 to vector<8x128xf32>
    %10 = arith.addf %9, %8 : vector<8x128xf32>
    %cst_7 = arith.constant 1.000000e+00 : f32
    %11 = vector.broadcast %cst_7 : f32 to vector<8x128xf32>
    %12 = arith.divf %11, %10 : vector<8x128xf32>
    %c0_8 = arith.constant 0 : index
    %c0_9 = arith.constant 0 : index
    %13 = vector.load %arg2[%c0_8, %c0_9] : memref<8x128xf32, #tpu.memory_space<vmem>>, vector<8x128xf32>
    %14 = arith.mulf %12, %13 : vector<8x128xf32>
    %c0_10 = arith.constant 0 : index
    %c0_11 = arith.constant 0 : index
    %15 = vector.load %arg5[%c0_10, %c0_11] : memref<128x128xf32, #tpu.memory_space<vmem>>, vector<128x128xf32>
    %cst_12 = arith.constant dense<0.000000e+00> : vector<8x128xf32>
    %16 = tpu.matmul %14, %15, %cst_12 {dimension_numbers = #tpu.dot_dimension_numbers<[1], [0], [0], [1], [0, 0, 1, 1], [], []>} : vector<8x128xf32>, vector<128x128xf32>, vector<8x128xf32> -> vector<8x128xf32>
    %c0_13 = arith.constant 0 : index
    %c0_14 = arith.constant 0 : index
    %17 = vector.load %arg6[%c0_13, %c0_14] : memref<1x128xf32, #tpu.memory_space<vmem>>, vector<1x128xf32>
    %18 = vector.broadcast %17 : vector<1x128xf32> to vector<8x128xf32>
    %19 = arith.addf %16, %18 : vector<8x128xf32>
    %c0_15 = arith.constant 0 : index
    %c0_16 = arith.constant 0 : index
    %20 = vector.load %arg7[%c0_15, %c0_16] : memref<8x128xf32, #tpu.memory_space<vmem>>, vector<8x128xf32>
    tpu.vector_store %arg7[%c0_15, %c0_16], %19 {strides = array<i32>} : memref<8x128xf32, #tpu.memory_space<vmem>>, vector<8x128xf32>,
    return
  }
  func.func @transform_0(%arg0: i32) -> (i32, i32) {
    %c0_i32 = arith.constant 0 : i32
    %c0_i32_0 = arith.constant 0 : i32
    return %arg0, %c0_i32 : i32, i32
  }
  func.func @transform_1(%arg0: i32) -> (i32, i32) {
    %c0_i32 = arith.constant 0 : i32
    %c0_i32_0 = arith.constant 0 : i32
    return %arg0, %c0_i32 : i32, i32
  }
  func.func @transform_2(%arg0: i32) -> (i32, i32) {
    %c0_i32 = arith.constant 0 : i32
    %c0_i32_0 = arith.constant 0 : i32
    %c0_i32_1 = arith.constant 0 : i32
    return %c0_i32, %c0_i32_0 : i32, i32
  }
  func.func @transform_3(%arg0: i32) -> (i32, i32) {
    %c0_i32 = arith.constant 0 : i32
    %c0_i32_0 = arith.constant 0 : i32
    %c0_i32_1 = arith.constant 0 : i32
    return %c0_i32, %c0_i32_0 : i32, i32
  }
  func.func @transform_4(%arg0: i32) -> (i32, i32) {
    %c0_i32 = arith.constant 0 : i32
    %c0_i32_0 = arith.constant 0 : i32
    %c0_i32_1 = arith.constant 0 : i32
    return %c0_i32, %c0_i32_0 : i32, i32
  }
  func.func @transform_5(%arg0: i32) -> (i32, i32) {
    %c0_i32 = arith.constant 0 : i32
    %c0_i32_0 = arith.constant 0 : i32
    %c0_i32_1 = arith.constant 0 : i32
    return %c0_i32, %c0_i32_0 : i32, i32
  }
  func.func @transform_6(%arg0: i32) -> (i32, i32) {
    %c0_i32 = arith.constant 0 : i32
    %c0_i32_0 = arith.constant 0 : i32
    return %arg0, %c0_i32 : i32, i32
  }
}

</mosaic_0001>

<llo_original>
// kernel: tpu_custom_call.1
$region0: #{tpu_custom_call.1}
  #allocation0 [shape = 'u32[]', space=smem, size = 0x4, offset = 0x4, fixed_abs, tag = 'smem constant byte address 0x4 - core index']
  #allocation1 [shape = 'u32[72,128]{1,0:T(1,128)}', space=vmem, size = 0x9000, scoped, tag = 'internal scratch']
  %s0 = inlined_call_operand.hbm [shape: f32[8,128], index: 0, kind: input, shape index: {}]
  %s1 = inlined_call_operand.hbm [shape: f32[8,128], index: 1, kind: input, shape index: {}]
  %s2 = inlined_call_operand.hbm [shape: f32[128,128], index: 2, kind: input, shape index: {}]
  %s3 = inlined_call_operand.vmem [shape: f32[1,128], index: 3, kind: input, shape index: {}]
  %s4 = inlined_call_operand.hbm [shape: f32[128,128], index: 4, kind: input, shape index: {}]
  %s5 = inlined_call_operand.vmem [shape: f32[1,128], index: 5, kind: input, shape index: {}]
  %s6 = inlined_call_operand.hbm [shape: f32[8,128], index: 6, kind: output, shape index: {}]
  %s7 = sld [smem:[#allocation0]]
  $region50: #{tpu_custom_call.1} parent=0
    _
  %s9 = ssub.s32 1, %s7
  %s10 = scalar_select 0, %s9, %s7
  $region1: #{tpu_custom_call.1} parent=0
    #allocation2 [shape = 'u8[4096]{0}', space=vmem, size = 0x1000, scoped, tag = 'input window, operand 0, single buffered']
    #allocation3 [shape = 's32[1]{0}', space=sflag, size = 0x4, scoped, tag = 'scoped memory for tpu_custom_call.1']
    #allocation4 [shape = 's32[1]{0}', space=sflag, size = 0x4, scoped, tag = 'scoped memory for tpu_custom_call.1']
    #allocation5 [shape = 'u8[4096]{0}', space=vmem, size = 0x1000, scoped, tag = 'input window, operand 1, single buffered']
    #allocation6 [shape = 's32[1]{0}', space=sflag, size = 0x4, scoped, tag = 'scoped memory for tpu_custom_call.1']
    #allocation7 [shape = 'u8[65536]{0}', space=vmem, size = 0x10000, scoped, tag = 'input window, operand 2, single buffered']
    #allocation8 [shape = 'u8[65536]{0}', space=vmem, size = 0x10000, scoped, tag = 'input window, operand 4, single buffered']
    #allocation9 [shape = 's32[1]{0}', space=sflag, size = 0x4, scoped, tag = 'scoped memory for tpu_custom_call.1']
    #allocation10 [shape = 'u8[4096]{0}', space=vmem, size = 0x1000, scoped, tag = 'output window, operand 0, single buffered']
    %11 = vsyncpa [#allocation3], 0
    %12 = vsyncpa [#allocation6], 0
    %13 = vsyncpa [#allocation9], 0
    %14 = vsyncpa [#allocation4], 0
    // Predicated region
    $region2: #{tpu_custom_call.1} parent=1 // pred_check
      _
    $region3: #{tpu_custom_call.1} parent=1 // pred_check_branch
      %16 = sbr.rel (0) target = $region5
    $region4: #{tpu_custom_call.1} parent=1 // pred_region
      %18 = vsyncadd [#allocation3], 0
      %s20 = sshll.u32 %s0, 4
      %s21 = int_to_ptr.hbm [resolvable:$true] %s20
      %s22 = sshll.u32 [#allocation2], 4
      %s23 = int_to_ptr.vmem [resolvable:$true] %s22
      %25 = dma.hbm_to_vmem [thread:$0]  %s21, 128, %s23, [#allocation3]
    $region5: #{tpu_custom_call.1} parent=1 // pred_fallthru
      _
    // Predicated region
    $region6: #{tpu_custom_call.1} parent=1 // pred_check
      _
    $region7: #{tpu_custom_call.1} parent=1 // pred_check_branch
      %27 = sbr.rel (0) target = $region9
    $region8: #{tpu_custom_call.1} parent=1 // pred_region
      %29 = vsyncadd [#allocation6], 0
      %s31 = sshll.u32 %s1, 4
      %s32 = int_to_ptr.hbm [resolvable:$true] %s31
      %s33 = sshll.u32 [#allocation5], 4
      %s34 = int_to_ptr.vmem [resolvable:$true] %s33
      %36 = dma.hbm_to_vmem [thread:$0]  %s32, 128, %s34, [#allocation6]
    $region9: #{tpu_custom_call.1} parent=1 // pred_fallthru
      _
    // Predicated region
    $region10: #{tpu_custom_call.1} parent=1 // pred_check
      _
    $region11: #{tpu_custom_call.1} parent=1 // pred_check_branch
      %38 = sbr.rel (0) target = $region13
    $region12: #{tpu_custom_call.1} parent=1 // pred_region
      %40 = vsyncadd [#allocation6], 0
      %s41 = sshll.u32 %s2, 4
      %s42 = int_to_ptr.hbm [resolvable:$true] %s41
      %s43 = sshll.u32 [#allocation7], 4
      %s44 = int_to_ptr.vmem [resolvable:$true] %s43
      %49 = dma.hbm_to_vmem [thread:$0]  %s42, 2048, %s44, [#allocation6], 128, 128, 8
    $region13: #{tpu_custom_call.1} parent=1 // pred_fallthru
      _
    // Predicated region
    $region14: #{tpu_custom_call.1} parent=1 // pred_check
      _
    $region15: #{tpu_custom_call.1} parent=1 // pred_check_branch
      %51 = sbr.rel (0) target = $region17
    $region16: #{tpu_custom_call.1} parent=1 // pred_region
      _
    $region17: #{tpu_custom_call.1} parent=1 // pred_fallthru
      _
    // Predicated region
    $region18: #{tpu_custom_call.1} parent=1 // pred_check
      _
    $region19: #{tpu_custom_call.1} parent=1 // pred_check_branch
      %53 = sbr.rel (0) target = $region21
    $region20: #{tpu_custom_call.1} parent=1 // pred_region
      %55 = vsyncadd [#allocation9], 0
      %s56 = sshll.u32 %s4, 4
      %s57 = int_to_ptr.hbm [resolvable:$true] %s56
      %s58 = sshll.u32 [#allocation8], 4
      %s59 = int_to_ptr.vmem [resolvable:$true] %s58
      %64 = dma.hbm_to_vmem [thread:$0]  %s57, 2048, %s59, [#allocation9], 128, 128, 8
    $region21: #{tpu_custom_call.1} parent=1 // pred_fallthru
      _
    // Predicated region
    $region22: #{tpu_custom_call.1} parent=1 // pred_check
      _
    $region23: #{tpu_custom_call.1} parent=1 // pred_check_branch
      %66 = sbr.rel (0) target = $region25
    $region24: #{tpu_custom_call.1} parent=1 // pred_region
      _
    $region25: #{tpu_custom_call.1} parent=1 // pred_fallthru
      _
    // Predicated region
    $region26: #{tpu_custom_call.1} parent=1 // pred_check
      _
    $region27: #{tpu_custom_call.1} parent=1 // pred_check_branch
      %68 = sbr.rel (0) target = $region29
    $region28: #{tpu_custom_call.1} parent=1 // pred_region
      %70 = dma.done [#allocation3], 128
    $region29: #{tpu_custom_call.1} parent=1 // pred_fallthru
      _
    // Predicated region
    $region30: #{tpu_custom_call.1} parent=1 // pred_check
      _
    $region31: #{tpu_custom_call.1} parent=1 // pred_check_branch
      %72 = sbr.rel (0) target = $region33
    $region32: #{tpu_custom_call.1} parent=1 // pred_region
      %74 = dma.done [#allocation6], 128
    $region33: #{tpu_custom_call.1} parent=1 // pred_fallthru
      _
    // Predicated region
    $region34: #{tpu_custom_call.1} parent=1 // pred_check
      _
    $region35: #{tpu_custom_call.1} parent=1 // pred_check_branch
      %76 = sbr.rel (0) target = $region37
    $region36: #{tpu_custom_call.1} parent=1 // pred_region
      %78 = dma.done [#allocation6], 2048
    $region37: #{tpu_custom_call.1} parent=1 // pred_fallthru
      _
    // Predicated region
    $region38: #{tpu_custom_call.1} parent=1 // pred_check
      _
    $region39: #{tpu_custom_call.1} parent=1 // pred_check_branch
      %80 = sbr.rel (0) target = $region41
    $region40: #{tpu_custom_call.1} parent=1 // pred_region
      %82 = dma.done [#allocation9], 2048
    $region41: #{tpu_custom_call.1} parent=1 // pred_fallthru
      _
    %v83 = vld [vmem:[#allocation2] sm:$0xff]
    %v84 = vld [vmem:[#allocation7] sm:$0xff]
    %v85 = vld [vmem:[#allocation7 + $0x8] sm:$0xff]
    %v86 = vld [vmem:[#allocation7 + $0x10] sm:$0xff]
    %v87 = vld [vmem:[#allocation7 + $0x18] sm:$0xff]
    %v88 = vld [vmem:[#allocation7 + $0x20] sm:$0xff]
    %v89 = vld [vmem:[#allocation7 + $0x28] sm:$0xff]
    %v90 = vld [vmem:[#allocation7 + $0x30] sm:$0xff]
    %v91 = vld [vmem:[#allocation7 + $0x38] sm:$0xff]
    %v92 = vld [vmem:[#allocation7 + $0x40] sm:$0xff]
    %v93 = vld [vmem:[#allocation7 + $0x48] sm:$0xff]
    %v94 = vld [vmem:[#allocation7 + $0x50] sm:$0xff]
    %v95 = vld [vmem:[#allocation7 + $0x58] sm:$0xff]
    %v96 = vld [vmem:[#allocation7 + $0x60] sm:$0xff]
    %v97 = vld [vmem:[#allocation7 + $0x68] sm:$0xff]
    %v98 = vld [vmem:[#allocation7 + $0x70] sm:$0xff]
    %v99 = vld [vmem:[#allocation7 + $0x78] sm:$0xff]
    %v100 = vld [vmem:[%s3] sm:$0x1]
    %v102 = vperm.slane %v100, 0
    %104 = vmatpush.msra.mxu0 %v99
    %105 = vmatpush.msra.mxu0 %v98
    %106 = vmatpush.msra.mxu0 %v97
    %107 = vmatpush.msra.mxu0 %v96
    %108 = vmatpush.msra.mxu0 %v95
    %109 = vmatpush.msra.mxu0 %v94
    %110 = vmatpush.msra.mxu0 %v93
    %111 = vmatpush.msra.mxu0 %v92
    %112 = vmatpush.msra.mxu0 %v91
    %113 = vmatpush.msra.mxu0 %v90
    %114 = vmatpush.msra.mxu0 %v89
    %115 = vmatpush.msra.mxu0 %v88
    %116 = vmatpush.msra.mxu0 %v87
    %117 = vmatpush.msra.mxu0 %v86
    %118 = vmatpush.msra.mxu0 %v85
    %119 = vmatpush.msra.mxu0 %v84
    %120 = vmatmul.f32.gmra.mxu0 %v83
    %v121 = vpop.f32.mrf.mxu0
    %v122 = vadd.f32 %v102, %v121
    %123 = vdwg.mxu0
    %v124 = vsub.f32 0.0, %v122
    %v125 = vmul.f32 %v124, 1.442695
    %v126 = vpow.pop %v125
    %v127 = vadd.f32 %v126, 1.0
    %v128 = vrcp.pop %v127
    %v129 = vmul.f32 %v127, %v128
    %v130 = vsub.f32 1.0, %v129
    %v131 = vmul.f32 %v128, %v130
    %v132 = vadd.f32 %v128, %v131
    %vm133 = vweird.f32 %v127
    %vm134 = vweird.f32 %v128
    %vm135 = vmor %vm133, %vm134
    %v136 = vsel %vm135, %v128, %v132
    %v137 = vand.u32 2147483647, %v127
    %vm138 = vcmp.eq.f32.partialorder %v137, 8.507059e+37
    %v139 = vand.u32 %v127, 2147483648
    %v140 = vor.u32 1.1754944e-38, %v139
    %v141 = vsel %vm138, %v140, %v136
    %v142 = vmul.f32 1.0, %v141
    %v143 = vld [vmem:[#allocation5] sm:$0xff]
    %v144 = vmul.f32 %v142, %v143
    %v145 = vld [vmem:[#allocation8] sm:$0xff]
    %v146 = vld [vmem:[#allocation8 + $0x8] sm:$0xff]
    %v147 = vld [vmem:[#allocation8 + $0x10] sm:$0xff]
    %v148 = vld [vmem:[#allocation8 + $0x18] sm:$0xff]
    %v149 = vld [vmem:[#allocation8 + $0x20] sm:$0xff]
    %v150 = vld [vmem:[#allocation8 + $0x28] sm:$0xff]
    %v151 = vld [vmem:[#allocation8 + $0x30] sm:$0xff]
    %v152 = vld [vmem:[#allocation8 + $0x38] sm:$0xff]
    %v153 = vld [vmem:[#allocation8 + $0x40] sm:$0xff]
    %v154 = vld [vmem:[#allocation8 + $0x48] sm:$0xff]
    %v155 = vld [vmem:[#allocation8 + $0x50] sm:$0xff]
    %v156 = vld [vmem:[#allocation8 + $0x58] sm:$0xff]
    %v157 = vld [vmem:[#allocation8 + $0x60] sm:$0xff]
    %v158 = vld [vmem:[#allocation8 + $0x68] sm:$0xff]
    %v159 = vld [vmem:[#allocation8 + $0x70] sm:$0xff]
    %v160 = vld [vmem:[#allocation8 + $0x78] sm:$0xff]
    %v161 = vld [vmem:[%s5] sm:$0x1]
    %v163 = vperm.slane %v161, 0
    %165 = vmatpush.msra.mxu0 %v160
    %166 = vmatpush.msra.mxu0 %v159
    %167 = vmatpush.msra.mxu0 %v158
    %168 = vmatpush.msra.mxu0 %v157
    %169 = vmatpush.msra.mxu0 %v156
    %170 = vmatpush.msra.mxu0 %v155
    %171 = vmatpush.msra.mxu0 %v154
    %172 = vmatpush.msra.mxu0 %v153
    %173 = vmatpush.msra.mxu0 %v152
    %174 = vmatpush.msra.mxu0 %v151
    %175 = vmatpush.msra.mxu0 %v150
    %176 = vmatpush.msra.mxu0 %v149
    %177 = vmatpush.msra.mxu0 %v148
    %178 = vmatpush.msra.mxu0 %v147
    %179 = vmatpush.msra.mxu0 %v146
    %180 = vmatpush.msra.mxu0 %v145
    %181 = vmatmul.f32.gmra.mxu0 %v144
    %v182 = vpop.f32.mrf.mxu0
    %v183 = vadd.f32 %v163, %v182
    %184 = vdwg.mxu0
    %185 = vst [vmem:[#allocation10] sm:$0xff] %v183
    // Predicated region
    $region42: #{tpu_custom_call.1} parent=1 // pred_check
      _
    $region43: #{tpu_custom_call.1} parent=1 // pred_check_branch
      %187 = sbr.rel (0) target = $region45
    $region44: #{tpu_custom_call.1} parent=1 // pred_region
      %189 = vsyncadd [#allocation4], 0
      %s191 = sshll.u32 [#allocation10], 4
      %s192 = int_to_ptr.vmem [resolvable:$true] %s191
      %s193 = sshll.u32 %s6, 4
      %s194 = int_to_ptr.hbm [resolvable:$true] %s193
      %196 = dma.vmem_to_hbm [thread:$0]  %s192, 128, %s194, [#allocation4]
    $region45: #{tpu_custom_call.1} parent=1 // pred_fallthru
      _
    // Predicated region
    $region46: #{tpu_custom_call.1} parent=1 // pred_check
      _
    $region47: #{tpu_custom_call.1} parent=1 // pred_check_branch
      %198 = sbr.rel (0) target = $region49
    $region48: #{tpu_custom_call.1} parent=1 // pred_region
      %200 = dma.done [#allocation4], 128
    $region49: #{tpu_custom_call.1} parent=1 // pred_fallthru
      _
    %201 = vsyncpa [#allocation3], 1
    %202 = vsyncpa [#allocation6], 1
    %203 = vsyncpa [#allocation9], 1
    %204 = vsyncpa [#allocation4], 1

</llo_original>
